<compile_context>
chip_gen: v5e
topology: v5e:2x2
jax: 0.10.0
libtpu: 0.0.40
codegen_flags: <defaults>
</compile_context>

<pallas_src>
import jax
import jax.numpy as jnp
from jax.experimental import pallas as pl
from jax.experimental.pallas import tpu as pltpu

LANE = 128
TARGET_BLOCK_ELEMS = 1 << 20     # 4 MiB per f32 block; x2 bufs x (in+out) = 16 MiB VMEM
NEG_CLAMP = 25.0                 # |smish(x)| < 1e-9 for x < -25; keeps exp/poly finite


def _smish_kernel(x_ref, o_ref):
    xf = x_ref[...].astype(jnp.float32)
    # t = exp(-x), clamped so t and t^2 stay finite in f32 for very negative x.
    t = jnp.exp(jnp.minimum(-xf, NEG_CLAMP))
    num = 3.0 + 2.0 * t
    den = (2.0 * t) * t + 6.0 * t + 5.0
    y = xf * (num / den)
    # Exact asymptote (0) for huge negative inputs where the clamp was active.
    y = jnp.where(xf < -NEG_CLAMP, 0.0, y)
    o_ref[...] = y.astype(o_ref.dtype)


def _pick_width(n):
    # Widest lane-dense last dim that divides n exactly (zero-copy reshape).
    for w in (1024, 512, 256, 128):
        if n % w == 0:
            return w
    return 0


def smish(x):
    orig_shape = x.shape
    orig_dtype = x.dtype
    flat = x.reshape(-1)
    n = flat.shape[0]

    w = _pick_width(n)
    padded = w == 0
    if padded:
        # Rare fallback (n not a multiple of 128): pad only up to a lane multiple.
        w = LANE
        n_pad = pl.cdiv(n, LANE) * LANE
        flat = jnp.pad(flat, (0, n_pad - n))
    rows = flat.shape[0] // w
    slab = flat.reshape(rows, w)

    # ~4 MiB per block; rows-per-block is a multiple of 8, or the full extent.
    block_rows = max(8, (TARGET_BLOCK_ELEMS // w) // 8 * 8)
    if block_rows >= rows:
        block_rows = rows
    grid = (pl.cdiv(rows, block_rows),)

    out = pl.pallas_call(
        _smish_kernel,
        out_shape=jax.ShapeDtypeStruct((rows, w), orig_dtype),
        grid_spec=pltpu.PrefetchScalarGridSpec(
            num_scalar_prefetch=0,
            grid=grid,
            in_specs=[pl.BlockSpec((block_rows, w), lambda i: (i, 0))],
            out_specs=pl.BlockSpec((block_rows, w), lambda i: (i, 0)),
        ),
        compiler_params=pltpu.CompilerParams(
            dimension_semantics=("parallel",),
            vmem_limit_bytes=32 << 20,  # headroom over the 16 MiB peak (v5e default is 16 MiB)
        ),
    )(slab)

    if padded:
        return out.reshape(-1)[:n].reshape(orig_shape)
    return out.reshape(orig_shape)


def smish_ref(x):
    xf = x.astype(jnp.float32)
    return (xf * jnp.tanh(jnp.log1p(jax.nn.sigmoid(xf)))).astype(x.dtype)


if __name__ == "__main__":
    key = jax.random.PRNGKey(0)
    # Small NCHW-style input consistent with the module's usage.
    x = jax.random.normal(key, (2, 4, 16, 16), dtype=jnp.float32)

    y = smish(x)
    jax.block_until_ready(y)

    y_ref = smish_ref(x)
    assert y.shape == x.shape and y.dtype == x.dtype
    assert jnp.allclose(y, y_ref, atol=1e-5, rtol=1e-5)

    # Exercise extreme inputs to confirm the clamped rewrite is stable.
    x_edge = jnp.array([-1e9, -100.0, -30.0, -5.0, 0.0, 5.0, 100.0, 1e9],
                       dtype=jnp.float32)
    y_edge = smish(x_edge)
    jax.block_until_ready(y_edge)
    assert jnp.all(jnp.isfinite(y_edge))
    assert jnp.allclose(y_edge, smish_ref(x_edge), atol=1e-5, rtol=1e-5)

    # Non-multiple-of-128 fallback path.
    x_odd = jax.random.normal(key, (37,), dtype=jnp.float32)
    y_odd = smish(x_odd)
    jax.block_until_ready(y_odd)
    assert jnp.allclose(y_odd, smish_ref(x_odd), atol=1e-5, rtol=1e-5)

    print("KERNEL_OK")
</pallas_src>

<mosaic_0001>
module attributes {stable_mosaic.version = 11 : i64} {
  func.func @_smish_kernel(%arg0: i32, %arg1: memref<2x1024xf32, #tpu.memory_space<vmem>>, %arg2: memref<2x1024xf32, #tpu.memory_space<vmem>>) attributes {dimension_semantics = [#tpu.dimension_semantics<parallel>], iteration_bounds = array<i64: 1>, scalar_prefetch = 0 : i64, scratch_operands = 0 : i64, tpu.core_type = #tpu.core_type<tc>, window_params = [{transform_indices = @transform_0, window_bounds = array<i64: 2, 1024>}, {transform_indices = @transform_1, window_bounds = array<i64: 2, 1024>}]} {
    %c0 = arith.constant 0 : index
    %c0_0 = arith.constant 0 : index
    %0 = vector.load %arg1[%c0, %c0_0] : memref<2x1024xf32, #tpu.memory_space<vmem>>, vector<2x1024xf32>
    %cst = arith.constant 0.000000e+00 : f32
    %1 = vector.broadcast %cst : f32 to vector<2x1024xf32>
    %2 = arith.subf %1, %0 : vector<2x1024xf32>
    %cst_1 = arith.constant 2.500000e+01 : f32
    %3 = vector.broadcast %cst_1 : f32 to vector<2x1024xf32>
    %4 = arith.minimumf %2, %3 : vector<2x1024xf32>
    %5 = math.exp %4 : vector<2x1024xf32>
    %cst_2 = arith.constant 2.000000e+00 : f32
    %6 = vector.broadcast %cst_2 : f32 to vector<2x1024xf32>
    %7 = arith.mulf %6, %5 : vector<2x1024xf32>
    %cst_3 = arith.constant 3.000000e+00 : f32
    %8 = vector.broadcast %cst_3 : f32 to vector<2x1024xf32>
    %9 = arith.addf %8, %7 : vector<2x1024xf32>
    %cst_4 = arith.constant 2.000000e+00 : f32
    %10 = vector.broadcast %cst_4 : f32 to vector<2x1024xf32>
    %11 = arith.mulf %10, %5 : vector<2x1024xf32>
    %12 = arith.mulf %11, %5 : vector<2x1024xf32>
    %cst_5 = arith.constant 6.000000e+00 : f32
    %13 = vector.broadcast %cst_5 : f32 to vector<2x1024xf32>
    %14 = arith.mulf %13, %5 : vector<2x1024xf32>
    %15 = arith.addf %12, %14 : vector<2x1024xf32>
    %cst_6 = arith.constant 5.000000e+00 : f32
    %16 = vector.broadcast %cst_6 : f32 to vector<2x1024xf32>
    %17 = arith.addf %15, %16 : vector<2x1024xf32>
    %18 = arith.divf %9, %17 : vector<2x1024xf32>
    %19 = arith.mulf %0, %18 : vector<2x1024xf32>
    %cst_7 = arith.constant -2.500000e+01 : f32
    %20 = vector.broadcast %cst_7 : f32 to vector<2x1024xf32>
    %21 = arith.cmpf olt, %0, %20 : vector<2x1024xf32>
    %cst_8 = arith.constant 0.000000e+00 : f32
    %22 = vector.broadcast %cst_8 : f32 to vector<2x1024xf32>
    %23 = arith.select %21, %22, %19 : vector<2x1024xi1>, vector<2x1024xf32>
    %c0_9 = arith.constant 0 : index
    %c0_10 = arith.constant 0 : index
    %24 = vector.load %arg2[%c0_9, %c0_10] : memref<2x1024xf32, #tpu.memory_space<vmem>>, vector<2x1024xf32>
    tpu.vector_store %arg2[%c0_9, %c0_10], %23 {strides = array<i32>} : memref<2x1024xf32, #tpu.memory_space<vmem>>, vector<2x1024xf32>,
    return
  }
  func.func @transform_0(%arg0: i32) -> (i32, i32) {
    %c0_i32 = arith.constant 0 : i32
    %c0_i32_0 = arith.constant 0 : i32
    return %arg0, %c0_i32 : i32, i32
  }
  func.func @transform_1(%arg0: i32) -> (i32, i32) {
    %c0_i32 = arith.constant 0 : i32
    %c0_i32_0 = arith.constant 0 : i32
    return %arg0, %c0_i32 : i32, i32
  }
}

</mosaic_0001>

<llo_original>
// kernel: tpu_custom_call.1
$region0: #{tpu_custom_call.1}
  #allocation0 [shape = 'u32[]', space=smem, size = 0x4, offset = 0x4, fixed_abs, tag = 'smem constant byte address 0x4 - core index']
  #allocation1 [shape = 'u32[72,128]{1,0:T(1,128)}', space=vmem, size = 0x9000, scoped, tag = 'internal scratch']
  %s0 = inlined_call_operand.hbm [shape: f32[2,1024], index: 0, kind: input, shape index: {}]
  %s1 = inlined_call_operand.hbm [shape: f32[2,1024], index: 1, kind: output, shape index: {}]
  %s2 = sld [smem:[#allocation0]]
  $region18: #{tpu_custom_call.1} parent=0
    _
  %s4 = ssub.s32 1, %s2
  %s5 = scalar_select 0, %s4, %s2
  $region1: #{tpu_custom_call.1} parent=0
    #allocation2 [shape = 'u8[8192]{0}', space=vmem, size = 0x2000, scoped, tag = 'input window, operand 0, single buffered']
    #allocation3 [shape = 's32[1]{0}', space=sflag, size = 0x4, scoped, tag = 'scoped memory for tpu_custom_call.1']
    #allocation4 [shape = 's32[1]{0}', space=sflag, size = 0x4, scoped, tag = 'scoped memory for tpu_custom_call.1']
    #allocation5 [shape = 'u8[8192]{0}', space=vmem, size = 0x2000, scoped, tag = 'output window, operand 0, single buffered']
    %6 = vsyncpa [#allocation3], 0
    %7 = vsyncpa [#allocation4], 0
    // Predicated region
    $region2: #{tpu_custom_call.1} parent=1 // pred_check
      _
    $region3: #{tpu_custom_call.1} parent=1 // pred_check_branch
      %9 = sbr.rel (0) target = $region5
    $region4: #{tpu_custom_call.1} parent=1 // pred_region
      %11 = vsyncadd [#allocation3], 0
      %s13 = sshll.u32 %s0, 4
      %s14 = int_to_ptr.hbm [resolvable:$true] %s13
      %s15 = sshll.u32 [#allocation2], 4
      %s16 = int_to_ptr.vmem [resolvable:$true] %s15
      %18 = dma.hbm_to_vmem [thread:$0]  %s14, 256, %s16, [#allocation3]
    $region5: #{tpu_custom_call.1} parent=1 // pred_fallthru
      _
    // Predicated region
    $region6: #{tpu_custom_call.1} parent=1 // pred_check
      _
    $region7: #{tpu_custom_call.1} parent=1 // pred_check_branch
      %20 = sbr.rel (0) target = $region9
    $region8: #{tpu_custom_call.1} parent=1 // pred_region
      %22 = dma.done [#allocation3], 256
    $region9: #{tpu_custom_call.1} parent=1 // pred_fallthru
      _
    %v23 = vld [vmem:[#allocation2] sm:$0xff]
    %v24 = vld [vmem:[#allocation2 + $0x8] sm:$0xff]
    %v25 = vsub.f32 0.0, %v23
    %v26 = vsub.f32 0.0, %v24
    %v27 = vmin.f32 %v25, 25.0
    %v28 = vmin.f32 %v26, 25.0
    %v29 = vmul.f32 %v27, 1.442695
    %v30 = vpow.pop %v29
    %v31 = vmul.f32 %v28, 1.442695
    %v32 = vpow.pop %v31
    %v33 = vmul.f32 %v30, 2.0
    %v34 = vmul.f32 %v32, 2.0
    %v35 = vadd.f32 %v33, 3.0
    %v36 = vadd.f32 %v34, 3.0
    %v37 = vmul.f32 %v33, %v30
    %v38 = vmul.f32 %v34, %v32
    %v39 = vmul.f32 %v30, 6.0
    %v40 = vmul.f32 %v32, 6.0
    %v41 = vadd.f32 %v37, %v39
    %v42 = vadd.f32 %v38, %v40
    %v43 = vadd.f32 %v41, 5.0
    %v44 = vadd.f32 %v42, 5.0
    %v45 = vrcp.pop %v43
    %v46 = vmul.f32 %v43, %v45
    %v47 = vsub.f32 1.0, %v46
    %v48 = vmul.f32 %v45, %v47
    %v49 = vadd.f32 %v45, %v48
    %vm50 = vweird.f32 %v43
    %vm51 = vweird.f32 %v45
    %vm52 = vmor %vm50, %vm51
    %v53 = vsel %vm52, %v45, %v49
    %v54 = vand.u32 2147483647, %v43
    %vm55 = vcmp.eq.f32.partialorder %v54, 8.507059e+37
    %v56 = vand.u32 %v43, 2147483648
    %v57 = vor.u32 1.1754944e-38, %v56
    %v58 = vsel %vm55, %v57, %v53
    %v59 = vmul.f32 %v35, %v58
    %v60 = vrcp.pop %v44
    %v61 = vmul.f32 %v44, %v60
    %v62 = vsub.f32 1.0, %v61
    %v63 = vmul.f32 %v60, %v62
    %v64 = vadd.f32 %v60, %v63
    %vm65 = vweird.f32 %v44
    %vm66 = vweird.f32 %v60
    %vm67 = vmor %vm65, %vm66
    %v68 = vsel %vm67, %v60, %v64
    %v69 = vand.u32 2147483647, %v44
    %vm70 = vcmp.eq.f32.partialorder %v69, 8.507059e+37
    %v71 = vand.u32 %v44, 2147483648
    %v72 = vor.u32 1.1754944e-38, %v71
    %v73 = vsel %vm70, %v72, %v68
    %v74 = vmul.f32 %v36, %v73
    %v75 = vmul.f32 %v23, %v59
    %v76 = vmul.f32 %v24, %v74
    %vm77 = vcmp.lt.f32.partialorder %v23, -25.0
    %vm78 = vcmp.lt.f32.partialorder %v24, -25.0
    %v79 = vsel %vm77, 0.0, %v75
    %v80 = vsel %vm78, 0.0, %v76
    %81 = vst [vmem:[#allocation5] sm:$0xff] %v79
    %82 = vst [vmem:[#allocation5 + $0x8] sm:$0xff] %v80
    // Predicated region
    $region10: #{tpu_custom_call.1} parent=1 // pred_check
      _
    $region11: #{tpu_custom_call.1} parent=1 // pred_check_branch
      %84 = sbr.rel (0) target = $region13
    $region12: #{tpu_custom_call.1} parent=1 // pred_region
      %86 = vsyncadd [#allocation4], 0
      %s88 = sshll.u32 [#allocation5], 4
      %s89 = int_to_ptr.vmem [resolvable:$true] %s88
      %s90 = sshll.u32 %s1, 4
      %s91 = int_to_ptr.hbm [resolvable:$true] %s90
      %93 = dma.vmem_to_hbm [thread:$0]  %s89, 256, %s91, [#allocation4]
    $region13: #{tpu_custom_call.1} parent=1 // pred_fallthru
      _
    // Predicated region
    $region14: #{tpu_custom_call.1} parent=1 // pred_check
      _
    $region15: #{tpu_custom_call.1} parent=1 // pred_check_branch
      %95 = sbr.rel (0) target = $region17
    $region16: #{tpu_custom_call.1} parent=1 // pred_region
      %97 = dma.done [#allocation4], 256
    $region17: #{tpu_custom_call.1} parent=1 // pred_fallthru
      _
    %98 = vsyncpa [#allocation3], 1
    %99 = vsyncpa [#allocation4], 1

</llo_original>
